<compile_context>
chip_gen: v5e
topology: v5e:2x2
jax: 0.10.0
libtpu: 0.0.40
codegen_flags: <defaults>
</compile_context>

<pallas_src>
import math

import jax
import jax.numpy as jnp
from jax.experimental import pallas as pl
from jax.experimental.pallas import tpu as pltpu


def _round_up(x: int, m: int) -> int:
    return ((x + m - 1) // m) * m


def _tpu_vmem_capacity_bytes() -> int:
    """Physical per-core VMEM; conservative (v7x, 64 MiB) fallback."""
    try:
        return int(pltpu.get_tpu_info().vmem_capacity_bytes)
    except Exception:
        return 64 << 20


# --------------------------------------------------------------------------
# Kernels.  Grid = (row tiles "parallel", h-chunks "arbitrary").
# x block index is constant over k -> DMA'd once per row tile.
# Output block index is constant over k -> VMEM-resident accumulator (P3).
# --------------------------------------------------------------------------
def _fw_kernel_mxu_reduce(x_ref, w0t_ref, b_ref, wcol_ref, o_ref, xb_ref):
    """Small d: final h-reduction on the (under-filled, otherwise idle) MXU."""
    k = pl.program_id(1)

    @pl.when(k == 0)
    def _():
        # Cast the f32 row tile to bf16 once per row tile (k is the minor axis).
        xb_ref[...] = x_ref[...].astype(jnp.bfloat16)
        o_ref[...] = jnp.zeros_like(o_ref)

    # MXU: bf16 x bf16 -> f32 accumulate.  1/sqrt(d) is already folded in W0T.
    hid = jnp.dot(xb_ref[...], w0t_ref[...], preferred_element_type=jnp.float32)
    hid = jnp.maximum(hid + b_ref[...], 0.0)          # bias + ReLU (VPU)
    # Per-chunk reduction as a 1-column f32 matmul accumulated into the
    # resident output block (MXU has slack when d is small).
    o_ref[...] += jnp.dot(hid, wcol_ref[...], preferred_element_type=jnp.float32)


def _fw_kernel_vpu_reduce(x_ref, w0t_ref, b_ref, wrow_ref, o_ref, xb_ref, acc_ref):
    """Large d: MXU is busy with the main matmul; reduce on VPU/XLU slack
    with a lane-dense (block_n, 128) partial accumulator; one deferred
    cross-lane XLU reduce at the last h-chunk."""
    k = pl.program_id(1)

    @pl.when(k == 0)
    def _():
        xb_ref[...] = x_ref[...].astype(jnp.bfloat16)
        acc_ref[...] = jnp.zeros_like(acc_ref)

    hid = jnp.dot(xb_ref[...], w0t_ref[...], preferred_element_type=jnp.float32)
    hid = jnp.maximum(hid + b_ref[...], 0.0)          # bias + ReLU (VPU)
    prod = hid * wrow_ref[...]                        # VPU
    tn, hc = prod.shape
    # Lane-dense partial sums: fold h_chunk into groups of 128 lanes.
    acc_ref[...] += prod.reshape(tn, hc // 128, 128).sum(axis=1)

    @pl.when(k == pl.num_programs(1) - 1)
    def _():
        o_ref[...] = jnp.sum(acc_ref[...], axis=-1, keepdims=True).astype(o_ref.dtype)


# --------------------------------------------------------------------------
# One-time parameter prep (W0 is a fixed buffer): transpose + fold scales +
# zero-pad h to a multiple of 256 (numerically exact).
# --------------------------------------------------------------------------
def make_fixed_weights_params(W0, B, W, *, bias=1.0):
    h, d = W0.shape
    h_pad = _round_up(h, 256)
    w0t = (W0.T / math.sqrt(d)).astype(jnp.bfloat16)           # (d, h)
    B = B.astype(jnp.float32)
    W = W.astype(jnp.float32)
    if h_pad != h:
        w0t = jnp.pad(w0t, ((0, 0), (0, h_pad - h)))
        B = jnp.pad(B, (0, h_pad - h))
        W = jnp.pad(W, (0, h_pad - h))
    b_row = (bias * B).reshape(1, h_pad).astype(jnp.float32)    # (1, h_pad)
    w_vec = (W / h).astype(jnp.float32)                         # (h_pad,)  (÷ original h)
    return w0t, b_row, w_vec


def fixed_weights_forward(x, w0t, b_row, w_vec, *, block_n=None, h_chunk=None):
    """x: (N, d) f32.  Returns (N,) f32."""
    N, d = x.shape
    d2, h_pad = w0t.shape
    assert d == d2 and b_row.shape == (1, h_pad) and w_vec.shape == (h_pad,)
    assert h_pad % 256 == 0

    vmem_cap = _tpu_vmem_capacity_bytes()
    big_vmem = vmem_cap > (96 << 20)          # v5e / v6e (128 MiB) vs v7x (64 MiB)

    # ---- row tile ---------------------------------------------------------
    default_bn = 1024 if big_vmem else 512    # multiples of 256 (MXU fill)
    if block_n is None:
        if N >= 2 * default_bn:
            block_n = default_bn
        elif N > 512:
            # keep both megacore TensorCores busy on mid-sized N
            block_n = _round_up(pl.cdiv(N, 2), 256)
        else:
            block_n = _round_up(N, 8)
    block_n = max(8, _round_up(block_n, 8))
    block_n = min(block_n, _round_up(N, 8))

    # ---- streamed h chunk (must divide the padded h) ----------------------
    if h_chunk is None:
        target = 1024 if big_vmem else 512
        h_chunk = max(256, (min(h_pad, target) // 256) * 256)
        while h_pad % h_chunk:
            h_chunk -= 256
    assert h_pad % h_chunk == 0 and h_chunk % 128 == 0

    grid_n = pl.cdiv(N, block_n)              # ragged last tile handled by Pallas
    grid_h = h_pad // h_chunk
    use_mxu_reduce = d < 256

    # ---- VMEM budget (streamed chunks; per-generation cap) ----------------
    needed = (2 * block_n * d * 4             # x tile, f32, double-buffered
              + block_n * d * 2               # bf16 x scratch
              + 2 * d * h_chunk * 2           # streamed W0T chunk, double-buffered
              + 2 * 2 * h_chunk * 4           # bias / W chunks
              + 2 * block_n * 4               # output block
              + block_n * 128 * 4             # lane-dense accumulator (VPU path)
              + 2 * block_n * h_chunk * 4)    # live (block_n, h_chunk) intermediates
    gen_cap = (96 << 20) if big_vmem else (48 << 20)
    vmem_limit = int(min(max(needed + (8 << 20), 32 << 20), gen_cap))

    cost = pl.CostEstimate(
        flops=2 * grid_n * block_n * d * h_pad + 4 * grid_n * block_n * h_pad,
        transcendentals=0,
        bytes_accessed=(N * d * 4 + grid_n * d * h_pad * 2 + 2 * h_pad * 4 + N * 4),
    )

    if use_mxu_reduce:
        kernel = _fw_kernel_mxu_reduce
        w_arg = w_vec.reshape(h_pad, 1)
        w_spec = pl.BlockSpec((h_chunk, 1), lambda i, k: (k, 0))
        scratch = [pltpu.VMEM((block_n, d), jnp.bfloat16)]
    else:
        kernel = _fw_kernel_vpu_reduce
        w_arg = w_vec.reshape(1, h_pad)
        w_spec = pl.BlockSpec((1, h_chunk), lambda i, k: (0, k))
        scratch = [pltpu.VMEM((block_n, d), jnp.bfloat16),
                   pltpu.VMEM((block_n, 128), jnp.float32)]

    out = pl.pallas_call(
        kernel,
        out_shape=jax.ShapeDtypeStruct((N, 1), jnp.float32),
        grid_spec=pltpu.PrefetchScalarGridSpec(
            num_scalar_prefetch=0,
            grid=(grid_n, grid_h),
            in_specs=[
                pl.BlockSpec((block_n, d), lambda i, k: (i, 0)),   # x row tile
                pl.BlockSpec((d, h_chunk), lambda i, k: (0, k)),   # streamed W0T/sqrt(d)
                pl.BlockSpec((1, h_chunk), lambda i, k: (0, k)),   # bias * B
                w_spec,                                            # W / h
            ],
            out_specs=pl.BlockSpec((block_n, 1), lambda i, k: (i, 0)),
            scratch_shapes=scratch,
        ),
        compiler_params=pltpu.CompilerParams(
            dimension_semantics=("parallel", "arbitrary"),
            vmem_limit_bytes=vmem_limit,
        ),
        cost_estimate=cost,
    )(x, w0t, b_row, w_arg)

    return out.reshape(N)


# --------------------------------------------------------------------------
# Reference + self-test
# --------------------------------------------------------------------------
def _reference(x, W0, B, W, bias=1.0):
    d = x.shape[1]
    h = W.shape[0]
    hidden = jax.nn.relu(x @ (W0.T / math.sqrt(d)) + bias * B)
    return hidden @ (W / h)


if __name__ == "__main__":
    root = jax.random.PRNGKey(0)

    def run_case(N, d, h, bias=1.0, **fw_kwargs):
        k1, k2, k3, k4 = jax.random.split(jax.random.fold_in(root, N * 1000 + d), 4)
        x = jax.random.normal(k1, (N, d), dtype=jnp.float32)
        W0 = jax.random.normal(k2, (h, d), dtype=jnp.float32)          # fixed buffer
        B = 0.1 * jax.random.normal(k3, (h,), dtype=jnp.float32)       # param
        W = jax.random.normal(k4, (h,), dtype=jnp.float32)             # param

        w0t, b_row, w_vec = make_fixed_weights_params(W0, B, W, bias=bias)
        out = fixed_weights_forward(x, w0t, b_row, w_vec, **fw_kwargs)
        out = jax.block_until_ready(out)

        ref = _reference(x, W0, B, W, bias=bias)
        assert out.shape == (N,)
        # bf16 x / W0T on the MXU, f32 accumulation -> bf16-level tolerance.
        assert jnp.allclose(out, ref, atol=2e-2, rtol=2e-2), (N, d, h)

    # Small-d case: MXU final reduction, single h-chunk, exact row tile.
    run_case(N=8, d=32, h=64)
    # Larger-d case: VPU/XLU lane-dense reduction, 2 row tiles with a ragged
    # last tile (no wrapper padding), 2 streamed h-chunks (h=384 -> h_pad=512).
    run_case(N=20, d=256, h=384, block_n=16, h_chunk=256)

    print("KERNEL_OK")
</pallas_src>

<mosaic_0001>
module attributes {stable_mosaic.version = 11 : i64} {
  func.func @_fw_kernel_mxu_reduce(%arg0: i32, %arg1: i32, %arg2: memref<8x32xf32, #tpu.memory_space<vmem>>, %arg3: memref<32x256xbf16, #tpu.memory_space<vmem>>, %arg4: memref<1x256xf32, #tpu.memory_space<vmem>>, %arg5: memref<256x1xf32, #tpu.memory_space<vmem>>, %arg6: memref<8x1xf32, #tpu.memory_space<vmem>>, %arg7: memref<8x32xbf16, #tpu.memory_space<vmem>>) attributes {dimension_semantics = [#tpu.dimension_semantics<parallel>, #tpu.dimension_semantics<arbitrary>], iteration_bounds = array<i64: 1, 1>, scalar_prefetch = 0 : i64, scratch_operands = 1 : i64, tpu.core_type = #tpu.core_type<tc>, window_params = [{transform_indices = @transform_0, window_bounds = array<i64: 8, 32>}, {transform_indices = @transform_1, window_bounds = array<i64: 32, 256>}, {transform_indices = @transform_2, window_bounds = array<i64: 1, 256>}, {transform_indices = @transform_3, window_bounds = array<i64: 256, 1>}, {transform_indices = @transform_4, window_bounds = array<i64: 8, 1>}]} {
    %c0_i32 = arith.constant 0 : i32
    %0 = arith.cmpi eq, %arg1, %c0_i32 : i32
    %1 = arith.extui %0 : i1 to i32
    %c0_i32_0 = arith.constant 0 : i32
    %2 = arith.cmpi ne, %1, %c0_i32_0 : i32
    scf.if %2 {
      %c0_14 = arith.constant 0 : index
      %c0_15 = arith.constant 0 : index
      %16 = vector.load %arg2[%c0_14, %c0_15] : memref<8x32xf32, #tpu.memory_space<vmem>>, vector<8x32xf32>
      %17 = arith.truncf %16 : vector<8x32xf32> to vector<8x32xbf16>
      %c0_16 = arith.constant 0 : index
      %c0_17 = arith.constant 0 : index
      %18 = vector.load %arg7[%c0_16, %c0_17] : memref<8x32xbf16, #tpu.memory_space<vmem>>, vector<8x32xbf16>
      tpu.vector_store %arg7[%c0_16, %c0_17], %17 {strides = array<i32>} : memref<8x32xbf16, #tpu.memory_space<vmem>>, vector<8x32xbf16>,
      %cst_18 = arith.constant 0.000000e+00 : f32
      %19 = vector.broadcast %cst_18 : f32 to vector<8x1xf32>
      %c0_19 = arith.constant 0 : index
      %c0_20 = arith.constant 0 : index
      %20 = vector.load %arg6[%c0_19, %c0_20] : memref<8x1xf32, #tpu.memory_space<vmem>>, vector<8x1xf32>
      tpu.vector_store %arg6[%c0_19, %c0_20], %19 {strides = array<i32>} : memref<8x1xf32, #tpu.memory_space<vmem>>, vector<8x1xf32>,
    } else {
    }
    %c0 = arith.constant 0 : index
    %c0_1 = arith.constant 0 : index
    %3 = vector.load %arg7[%c0, %c0_1] : memref<8x32xbf16, #tpu.memory_space<vmem>>, vector<8x32xbf16>
    %c0_2 = arith.constant 0 : index
    %c0_3 = arith.constant 0 : index
    %4 = vector.load %arg3[%c0_2, %c0_3] : memref<32x256xbf16, #tpu.memory_space<vmem>>, vector<32x256xbf16>
    %cst = arith.constant dense<0.000000e+00> : vector<8x256xf32>
    %5 = tpu.matmul %3, %4, %cst {dimension_numbers = #tpu.dot_dimension_numbers<[1], [0], [0], [1], [0, 0, 1, 1], [], []>} : vector<8x32xbf16>, vector<32x256xbf16>, vector<8x256xf32> -> vector<8x256xf32>
    %c0_4 = arith.constant 0 : index
    %c0_5 = arith.constant 0 : index
    %6 = vector.load %arg4[%c0_4, %c0_5] : memref<1x256xf32, #tpu.memory_space<vmem>>, vector<1x256xf32>
    %7 = vector.broadcast %6 : vector<1x256xf32> to vector<8x256xf32>
    %8 = arith.addf %5, %7 : vector<8x256xf32>
    %cst_6 = arith.constant 0.000000e+00 : f32
    %9 = vector.broadcast %cst_6 : f32 to vector<8x256xf32>
    %10 = arith.maximumf %8, %9 : vector<8x256xf32>
    %c0_7 = arith.constant 0 : index
    %c0_8 = arith.constant 0 : index
    %11 = vector.load %arg6[%c0_7, %c0_8] : memref<8x1xf32, #tpu.memory_space<vmem>>, vector<8x1xf32>
    %c0_9 = arith.constant 0 : index
    %c0_10 = arith.constant 0 : index
    %12 = vector.load %arg5[%c0_9, %c0_10] : memref<256x1xf32, #tpu.memory_space<vmem>>, vector<256x1xf32>
    %cst_11 = arith.constant dense<0.000000e+00> : vector<8x1xf32>
    %13 = tpu.matmul %10, %12, %cst_11 {dimension_numbers = #tpu.dot_dimension_numbers<[1], [0], [0], [1], [0, 0, 1, 1], [], []>} : vector<8x256xf32>, vector<256x1xf32>, vector<8x1xf32> -> vector<8x1xf32>
    %14 = arith.addf %11, %13 : vector<8x1xf32>
    %c0_12 = arith.constant 0 : index
    %c0_13 = arith.constant 0 : index
    %15 = vector.load %arg6[%c0_12, %c0_13] : memref<8x1xf32, #tpu.memory_space<vmem>>, vector<8x1xf32>
    tpu.vector_store %arg6[%c0_12, %c0_13], %14 {strides = array<i32>} : memref<8x1xf32, #tpu.memory_space<vmem>>, vector<8x1xf32>,
    return
  }
  func.func @transform_0(%arg0: i32, %arg1: i32) -> (i32, i32) {
    %c0_i32 = arith.constant 0 : i32
    %c0_i32_0 = arith.constant 0 : i32
    return %arg0, %c0_i32 : i32, i32
  }
  func.func @transform_1(%arg0: i32, %arg1: i32) -> (i32, i32) {
    %c0_i32 = arith.constant 0 : i32
    %c0_i32_0 = arith.constant 0 : i32
    return %c0_i32, %arg1 : i32, i32
  }
  func.func @transform_2(%arg0: i32, %arg1: i32) -> (i32, i32) {
    %c0_i32 = arith.constant 0 : i32
    %c0_i32_0 = arith.constant 0 : i32
    return %c0_i32, %arg1 : i32, i32
  }
  func.func @transform_3(%arg0: i32, %arg1: i32) -> (i32, i32) {
    %c0_i32 = arith.constant 0 : i32
    %c0_i32_0 = arith.constant 0 : i32
    return %arg1, %c0_i32 : i32, i32
  }
  func.func @transform_4(%arg0: i32, %arg1: i32) -> (i32, i32) {
    %c0_i32 = arith.constant 0 : i32
    %c0_i32_0 = arith.constant 0 : i32
    return %arg0, %c0_i32 : i32, i32
  }
}

</mosaic_0001>

<llo_original>
// kernel: tpu_custom_call.1
$region0: #{tpu_custom_call.1}
  #allocation0 [shape = 'u32[]', space=smem, size = 0x4, offset = 0x4, fixed_abs, tag = 'smem constant byte address 0x4 - core index']
  #allocation1 [shape = 'u32[72,128]{1,0:T(1,128)}', space=vmem, size = 0x9000, scoped, tag = 'internal scratch']
  #allocation2 [shape = 'bf16[8,32]{1,0:T(8,128)(2,1)}', space=vmem, size = 0x800, scoped, tag = 'scratch operand']
  %s0 = inlined_call_operand.vmem [shape: f32[8,32], index: 0, kind: input, shape index: {}]
  %s1 = inlined_call_operand.vmem [shape: bf16[32,256], index: 1, kind: input, shape index: {}]
  %s2 = inlined_call_operand.vmem [shape: f32[1,256], index: 2, kind: input, shape index: {}]
  %s3 = inlined_call_operand.vmem [shape: f32[256,1], index: 3, kind: input, shape index: {}]
  %s4 = inlined_call_operand.vmem [shape: f32[8,1], index: 4, kind: output, shape index: {}]
  %s5 = sld [smem:[#allocation0]]
  $region30: #{tpu_custom_call.1} parent=0
    _
  %s7 = ssub.s32 1, %s5
  %s8 = scalar_select 0, %s7, %s5
  // Predicated region
  $region2: #{tpu_custom_call.1} parent=0 // pred_check
    _
  $region3: #{tpu_custom_call.1} parent=0 // pred_check_branch
    %10 = sbr.rel (0) target = $region5
  $region4: #{tpu_custom_call.1} parent=0 // pred_region
    _
  $region5: #{tpu_custom_call.1} parent=0 // pred_fallthru
    _
  // Predicated region
  $region6: #{tpu_custom_call.1} parent=0 // pred_check
    _
  $region7: #{tpu_custom_call.1} parent=0 // pred_check_branch
    %12 = sbr.rel (0) target = $region9
  $region8: #{tpu_custom_call.1} parent=0 // pred_region
    _
  $region9: #{tpu_custom_call.1} parent=0 // pred_fallthru
    _
  // Predicated region
  $region10: #{tpu_custom_call.1} parent=0 // pred_check
    _
  $region11: #{tpu_custom_call.1} parent=0 // pred_check_branch
    %14 = sbr.rel (0) target = $region13
  $region12: #{tpu_custom_call.1} parent=0 // pred_region
    _
  $region13: #{tpu_custom_call.1} parent=0 // pred_fallthru
    _
  // Predicated region
  $region14: #{tpu_custom_call.1} parent=0 // pred_check
    _
  $region15: #{tpu_custom_call.1} parent=0 // pred_check_branch
    %16 = sbr.rel (0) target = $region17
  $region16: #{tpu_custom_call.1} parent=0 // pred_region
    _
  $region17: #{tpu_custom_call.1} parent=0 // pred_fallthru
    _
  %p18 = scmp.eq.s32.totalorder 0, 0
  // Predicated region
  $region18: #{tpu_custom_call.1} parent=0 // pred_check
    %p19 = pneg %p18
  $region19: #{tpu_custom_call.1} parent=0 // pred_check_branch
    %21 = sbr.rel (%p19) target = $region21
  $region20: #{tpu_custom_call.1} parent=0 // pred_region
    %v22 = vld [vmem:[%s0] sm:$0xff]
    %v23 = vpack.c.bf16 %v22, %v22
    %vm24 = vcmask 257024
    %25 = vst.msk [vmem:[#allocation2] sm:$0xf] %vm24, %v23
    %vm26 = vcmask 7168
    %27 = vst.msk [vmem:[%s4] sm:$0xff] %vm26, 0.0
  $region21: #{tpu_custom_call.1} parent=0 // pred_fallthru
    _
  %v28 = vld [vmem:[#allocation2] sm:$0xf]
  %v29 = vld [vmem:[%s1] sm:$0xff]
  %v30 = vld [vmem:[%s1 + $0x8] sm:$0xff]
  %v31 = vld [vmem:[%s1 + $0x10] sm:$0xff]
  %v32 = vld [vmem:[%s1 + $0x18] sm:$0xff]
  %v33 = vld [vmem:[%s2] sm:$0x3]
  %v35 = vperm.slane %v33, 0
  %v36 = vperm.slane %v33, 1
  %v43 = vunpack.c.l.b16 %v29
  %v44 = vunpack.c.h.b16 %v29
  %v45 = vunpack.c.l.b16 %v30
  %v46 = vunpack.c.h.b16 %v30
  %v47 = vunpack.c.l.b16 %v31
  %v48 = vunpack.c.h.b16 %v31
  %v49 = vunpack.c.l.b16 %v32
  %v50 = vunpack.c.h.b16 %v32
  %v51 = vpack.c.b16 %v45, %v43
  %v52 = vpack.c.b16 %v46, %v44
  %v53 = vpack.c.b16 %v49, %v47
  %v54 = vpack.c.b16 %v50, %v48
  %vm59 = vcmask 261120
  %v61 = vsel %vm59, %v28, 0
  %63 = vmatpush.bf16.msra.mxu0 0
  %64 = vmatpush.bf16.msra.mxu0 0
  %65 = vmatpush.bf16.msra.mxu0 0
  %66 = vmatpush.bf16.msra.mxu0 0
  %67 = vmatpush.bf16.msra.mxu0 0
  %68 = vmatpush.bf16.msra.mxu0 0
  %69 = vmatpush.bf16.msra.mxu0 %v53
  %70 = vmatpush.bf16.msra.mxu0 %v51
  %71 = vmatmul.bf16.gmra.mxu0 %v61
  %v72 = vpop.f32.mrf.mxu0
  %v73 = vadd.f32 %v35, %v72
  %v74 = vpop.f32.mrf.mxu0
  %75 = vdwg.mxu0
  %76 = vmatpush.bf16.msra.mxu0 0
  %77 = vmatpush.bf16.msra.mxu0 0
  %78 = vmatpush.bf16.msra.mxu0 0
  %79 = vmatpush.bf16.msra.mxu0 0
  %80 = vmatpush.bf16.msra.mxu0 0
  %81 = vmatpush.bf16.msra.mxu0 0
  %82 = vmatpush.bf16.msra.mxu0 %v54
  %83 = vmatpush.bf16.msra.mxu0 %v52
  %84 = vmatmul.bf16.gmra.mxu0 %v61
  %v85 = vpop.f32.mrf.mxu0
  %v86 = vadd.f32 %v36, %v85
  %v87 = vpop.f32.mrf.mxu0
  %88 = vdwg.mxu0
  %v89 = vmax.f32 %v73, 0.0
  %v90 = vmax.f32 %v86, 0.0
  %v91 = vld [vmem:[%s4] sm:$0xff]
  %v92 = vld [vmem:[%s3] sm:$0xff]
  %v93 = vld [vmem:[%s3 + $0x8] sm:$0xff]
  %v94 = vld [vmem:[%s3 + $0x10] sm:$0xff]
  %v95 = vld [vmem:[%s3 + $0x18] sm:$0xff]
  %v96 = vld [vmem:[%s3 + $0x20] sm:$0xff]
  %v97 = vld [vmem:[%s3 + $0x28] sm:$0xff]
  %v98 = vld [vmem:[%s3 + $0x30] sm:$0xff]
  %v99 = vld [vmem:[%s3 + $0x38] sm:$0xff]
  %v100 = vld [vmem:[%s3 + $0x40] sm:$0xff]
  %v101 = vld [vmem:[%s3 + $0x48] sm:$0xff]
  %v102 = vld [vmem:[%s3 + $0x50] sm:$0xff]
  %v103 = vld [vmem:[%s3 + $0x58] sm:$0xff]
  %v104 = vld [vmem:[%s3 + $0x60] sm:$0xff]
  %v105 = vld [vmem:[%s3 + $0x68] sm:$0xff]
  %v106 = vld [vmem:[%s3 + $0x70] sm:$0xff]
  %v107 = vld [vmem:[%s3 + $0x78] sm:$0xff]
  %v108 = vld [vmem:[%s3 + $0x80] sm:$0xff]
  %v109 = vld [vmem:[%s3 + $0x88] sm:$0xff]
  %v110 = vld [vmem:[%s3 + $0x90] sm:$0xff]
  %v111 = vld [vmem:[%s3 + $0x98] sm:$0xff]
  %v112 = vld [vmem:[%s3 + $0xa0] sm:$0xff]
  %v113 = vld [vmem:[%s3 + $0xa8] sm:$0xff]
  %v114 = vld [vmem:[%s3 + $0xb0] sm:$0xff]
  %v115 = vld [vmem:[%s3 + $0xb8] sm:$0xff]
  %v116 = vld [vmem:[%s3 + $0xc0] sm:$0xff]
  %v117 = vld [vmem:[%s3 + $0xc8] sm:$0xff]
  %v118 = vld [vmem:[%s3 + $0xd0] sm:$0xff]
  %v119 = vld [vmem:[%s3 + $0xd8] sm:$0xff]
  %v120 = vld [vmem:[%s3 + $0xe0] sm:$0xff]
  %v121 = vld [vmem:[%s3 + $0xe8] sm:$0xff]
  %v122 = vld [vmem:[%s3 + $0xf0] sm:$0xff]
  %v123 = vld [vmem:[%s3 + $0xf8] sm:$0xff]
  %124 = vmatpush.msra.mxu0 %v107
  %125 = vmatpush.msra.mxu0 %v106
  %126 = vmatpush.msra.mxu0 %v105
  %127 = vmatpush.msra.mxu0 %v104
  %128 = vmatpush.msra.mxu0 %v103
  %129 = vmatpush.msra.mxu0 %v102
  %130 = vmatpush.msra.mxu0 %v101
  %131 = vmatpush.msra.mxu0 %v100
  %132 = vmatpush.msra.mxu0 %v99
  %133 = vmatpush.msra.mxu0 %v98
  %134 = vmatpush.msra.mxu0 %v97
  %135 = vmatpush.msra.mxu0 %v96
  %136 = vmatpush.msra.mxu0 %v95
  %137 = vmatpush.msra.mxu0 %v94
  %138 = vmatpush.msra.mxu0 %v93
  %139 = vmatpush.msra.mxu0 %v92
  %140 = vmatmul.f32.gmra.mxu0 %v89
  %v141 = vpop.f32.mrf.mxu0
  %v142 = vadd.f32 0.0, %v141
  %143 = vdwg.mxu0
  %144 = vmatpush.msra.mxu0 %v123
  %145 = vmatpush.msra.mxu0 %v122
  %146 = vmatpush.msra.mxu0 %v121
  %147 = vmatpush.msra.mxu0 %v120
  %148 = vmatpush.msra.mxu0 %v119
  %149 = vmatpush.msra.mxu0 %v118
  %150 = vmatpush.msra.mxu0 %v117
  %151 = vmatpush.msra.mxu0 %v116
  %152 = vmatpush.msra.mxu0 %v115
  %153 = vmatpush.msra.mxu0 %v114
  %154 = vmatpush.msra.mxu0 %v113
  %155 = vmatpush.msra.mxu0 %v112
  %156 = vmatpush.msra.mxu0 %v111
  %157 = vmatpush.msra.mxu0 %v110
  %158 = vmatpush.msra.mxu0 %v109
  %159 = vmatpush.msra.mxu0 %v108
  %160 = vmatmul.f32.gmra.mxu0 %v90
  %v161 = vpop.f32.mrf.mxu0
  %v162 = vadd.f32 %v142, %v161
  %163 = vdwg.mxu0
  %v164 = vadd.f32 %v91, %v162
  %vm165 = vcmask 7168
  %166 = vst.msk [vmem:[%s4] sm:$0xff] %vm165, %v164
  // Predicated region
  $region22: #{tpu_custom_call.1} parent=0 // pred_check
    _
  $region23: #{tpu_custom_call.1} parent=0 // pred_check_branch
    %168 = sbr.rel (0) target = $region25
  $region24: #{tpu_custom_call.1} parent=0 // pred_region
    _
  $region25: #{tpu_custom_call.1} parent=0 // pred_fallthru
    _
  // Predicated region
  $region26: #{tpu_custom_call.1} parent=0 // pred_check
    _
  $region27: #{tpu_custom_call.1} parent=0 // pred_check_branch
    %170 = sbr.rel (0) target = $region29
  $region28: #{tpu_custom_call.1} parent=0 // pred_region
    _
  $region29: #{tpu_custom_call.1} parent=0 // pred_fallthru
    _

</llo_original>
